<compile_context>
chip_gen: v5e
topology: v5e:2x2
jax: 0.10.0
libtpu: 0.0.40
codegen_flags: <defaults>
</compile_context>

<pallas_src>
import jax
import jax.numpy as jnp
from jax import lax
from jax.experimental import pallas as pl
from jax.experimental.pallas import tpu as pltpu

MAX_TILE_B = 4096  # rows per grid step (multiple of 128); big enough to amortize step overhead


def _round_up(n: int, m: int) -> int:
    return -(-n // m) * m


def _mlp_kernel(x_ref, w1_ref, b1_ref, w2_ref, b2_ref, wp_ref, bp_ref, o_ref):
    # x_ref: (TILE_B, F) rows of this grid step (batch-major in HBM).
    # Everything downstream is feature-major (features on sublanes, batch on lanes).
    xb = x_ref[...].astype(jnp.bfloat16)

    # hidden1: contract F of (H, F) with F of (TILE_B, F) -> (H, TILE_B).  NT dot: no transpose op.
    h = lax.dot_general(w1_ref[...], xb, (((1,), (1,)), ((), ())),
                        preferred_element_type=jnp.float32)
    h = jnp.maximum(h + b1_ref[...], 0.0)          # f32 bias + ReLU

    # hidden2: (H, H) @ (H, TILE_B) -> (H, TILE_B)
    h = jnp.dot(w2_ref[...], h.astype(jnp.bfloat16), preferred_element_type=jnp.float32)
    h = jnp.maximum(h + b2_ref[...], 0.0)

    # predict (identity activation): (O, H) @ (H, TILE_B) -> (O, TILE_B); lane-dense result + store.
    y = jnp.dot(wp_ref[...], h.astype(jnp.bfloat16), preferred_element_type=jnp.float32)
    y = y + bp_ref[...]
    o_ref[...] = y.astype(o_ref.dtype)


@jax.jit
def net_forward(x, w1, b1, w2, b2, wp, bp):
    """Forward pass of Net (hidden_layers=2, ReLU hidden, identity predict).

    x : (batch, n_feature)
    w1: (n_hidden, n_feature), b1: (n_hidden,)    # PyTorch nn.Linear layout
    w2: (n_hidden, n_hidden),  b2: (n_hidden,)
    wp: (n_output, n_hidden),  bp: (n_output,)
    returns (batch, n_output) in x.dtype.
    Feeding bf16 x halves the HBM traffic of the (memory-bound) kernel; f32 x also works.
    """
    batch, n_feature = x.shape
    n_hidden = w1.shape[0]
    n_out = wp.shape[0]

    # ---- batch tiling -----------------------------------------------------
    if batch > MAX_TILE_B:
        tile_b = MAX_TILE_B                        # multiple of 128 -> legal lane-dim block
        padded = _round_up(batch, tile_b)
    else:
        tile_b = _round_up(batch, 8)               # single tile, sublane aligned
        padded = tile_b
    if padded != batch:
        x = jnp.pad(x, ((0, padded - batch), (0, 0)))
    grid = (pl.cdiv(padded, tile_b),)

    # ---- operand prep (tiny; weights cast to bf16 once, biases to f32 columns) ----
    w1b = w1.astype(jnp.bfloat16)
    w2b = w2.astype(jnp.bfloat16)
    wpb = wp.astype(jnp.bfloat16)
    b1c = b1.reshape(n_hidden, 1).astype(jnp.float32)
    b2c = b2.reshape(n_hidden, 1).astype(jnp.float32)
    bpc = bp.reshape(n_out, 1).astype(jnp.float32)

    const = lambda i: (0, 0)                       # same block every step -> VMEM-resident
    in_specs = [
        pl.BlockSpec((tile_b, n_feature), lambda i: (i, 0)),   # x tile (double-buffered)
        pl.BlockSpec((n_hidden, n_feature), const),            # w1
        pl.BlockSpec((n_hidden, 1), const),                    # b1
        pl.BlockSpec((n_hidden, n_hidden), const),             # w2
        pl.BlockSpec((n_hidden, 1), const),                    # b2
        pl.BlockSpec((n_out, n_hidden), const),                # wp
        pl.BlockSpec((n_out, 1), const),                       # bp
    ]
    out_specs = pl.BlockSpec((n_out, tile_b), lambda i: (0, i))  # lane-dense output tile

    flops = 2 * padded * (n_feature * n_hidden + n_hidden * n_hidden + n_hidden * n_out)
    bytes_accessed = (
        x.size * x.dtype.itemsize
        + (w1b.size + w2b.size + wpb.size) * 2
        + (b1c.size + b2c.size + bpc.size) * 4
        + padded * n_out * jnp.dtype(x.dtype).itemsize
    )

    out_t = pl.pallas_call(
        _mlp_kernel,
        grid=grid,
        in_specs=in_specs,
        out_specs=out_specs,
        out_shape=jax.ShapeDtypeStruct((n_out, padded), x.dtype),
        compiler_params=pltpu.CompilerParams(dimension_semantics=("parallel",)),
        cost_estimate=pl.CostEstimate(
            flops=int(flops), transcendentals=0, bytes_accessed=int(bytes_accessed)),
    )(x, w1b, b1c, w2b, b2c, wpb, bpc)

    return out_t[:, :batch].T                      # (batch, n_out)


def init_linear_params(key, fan_in, fan_out):
    """torch.nn.Linear-style init U(-1/sqrt(fan_in), 1/sqrt(fan_in)).
    Weight in PyTorch layout (out_features, in_features), bias (out_features,)."""
    kw, kb = jax.random.split(key)
    bound = 1.0 / (fan_in ** 0.5)
    w = jax.random.uniform(kw, (fan_out, fan_in), jnp.float32, -bound, bound)
    b = jax.random.uniform(kb, (fan_out,), jnp.float32, -bound, bound)
    return w, b


def reference_forward(x, w1, b1, w2, b2, wp, bp):
    h = jnp.maximum(x @ w1.T + b1, 0.0)
    h = jnp.maximum(h @ w2.T + b2, 0.0)
    return h @ wp.T + bp


if __name__ == "__main__":
    # Small shapes consistent with the module defaults (n_hidden=32, n_output=1, 2 hidden layers).
    batch, n_feature, n_hidden, n_output = 8, 16, 32, 1

    key = jax.random.PRNGKey(0)
    kx, k1, k2, kp = jax.random.split(key, 4)

    x = jax.random.normal(kx, (batch, n_feature), jnp.float32)
    w1, b1 = init_linear_params(k1, n_feature, n_hidden)   # hidden1
    w2, b2 = init_linear_params(k2, n_hidden, n_hidden)    # hidden2
    wp, bp = init_linear_params(kp, n_hidden, n_output)    # predict

    out = jax.block_until_ready(net_forward(x, w1, b1, w2, b2, wp, bp))

    # Reference with the same bf16 rounding the kernel applies to the MXU operands.
    rnd = lambda a: a.astype(jnp.bfloat16).astype(jnp.float32)
    ref = reference_forward(rnd(x), rnd(w1), b1, rnd(w2), b2, rnd(wp), bp)

    assert out.shape == (batch, n_output)
    assert jnp.allclose(out, ref, atol=1e-3, rtol=1e-3), float(jnp.max(jnp.abs(out - ref)))

    print("KERNEL_OK")
</pallas_src>

<mosaic_0001>
module attributes {stable_mosaic.version = 11 : i64} {
  func.func @_mlp_kernel(%arg0: i32, %arg1: memref<8x16xf32, #tpu.memory_space<vmem>>, %arg2: memref<32x16xbf16, #tpu.memory_space<vmem>>, %arg3: memref<32x1xf32, #tpu.memory_space<vmem>>, %arg4: memref<32x32xbf16, #tpu.memory_space<vmem>>, %arg5: memref<32x1xf32, #tpu.memory_space<vmem>>, %arg6: memref<1x32xbf16, #tpu.memory_space<vmem>>, %arg7: memref<1x1xf32, #tpu.memory_space<vmem>>, %arg8: memref<1x8xf32, #tpu.memory_space<vmem>>) attributes {dimension_semantics = [#tpu.dimension_semantics<parallel>], iteration_bounds = array<i64: 1>, scalar_prefetch = 0 : i64, scratch_operands = 0 : i64, tpu.core_type = #tpu.core_type<tc>, window_params = [{transform_indices = @transform_0, window_bounds = array<i64: 8, 16>}, {pipeline_mode = #tpu.pipeline_mode<synchronous>, transform_indices = @transform_1, window_bounds = array<i64: 32, 16>}, {pipeline_mode = #tpu.pipeline_mode<synchronous>, transform_indices = @transform_2, window_bounds = array<i64: 32, 1>}, {pipeline_mode = #tpu.pipeline_mode<synchronous>, transform_indices = @transform_3, window_bounds = array<i64: 32, 32>}, {pipeline_mode = #tpu.pipeline_mode<synchronous>, transform_indices = @transform_4, window_bounds = array<i64: 32, 1>}, {pipeline_mode = #tpu.pipeline_mode<synchronous>, transform_indices = @transform_5, window_bounds = array<i64: 1, 32>}, {pipeline_mode = #tpu.pipeline_mode<synchronous>, transform_indices = @transform_6, window_bounds = array<i64: 1, 1>}, {transform_indices = @transform_7, window_bounds = array<i64: 1, 8>}]} {
    %c0 = arith.constant 0 : index
    %c0_0 = arith.constant 0 : index
    %0 = vector.load %arg1[%c0, %c0_0] : memref<8x16xf32, #tpu.memory_space<vmem>>, vector<8x16xf32>
    %1 = arith.truncf %0 : vector<8x16xf32> to vector<8x16xbf16>
    %c0_1 = arith.constant 0 : index
    %c0_2 = arith.constant 0 : index
    %2 = vector.load %arg2[%c0_1, %c0_2] : memref<32x16xbf16, #tpu.memory_space<vmem>>, vector<32x16xbf16>
    %cst = arith.constant dense<0.000000e+00> : vector<32x8xf32>
    %3 = tpu.matmul %2, %1, %cst {dimension_numbers = #tpu.dot_dimension_numbers<[1], [1], [0], [0], [0, 0, 1, 0], [], []>} : vector<32x16xbf16>, vector<8x16xbf16>, vector<32x8xf32> -> vector<32x8xf32>
    %c0_3 = arith.constant 0 : index
    %c0_4 = arith.constant 0 : index
    %4 = vector.load %arg3[%c0_3, %c0_4] : memref<32x1xf32, #tpu.memory_space<vmem>>, vector<32x1xf32>
    %5 = vector.broadcast %4 : vector<32x1xf32> to vector<32x8xf32>
    %6 = arith.addf %3, %5 : vector<32x8xf32>
    %cst_5 = arith.constant 0.000000e+00 : f32
    %7 = vector.broadcast %cst_5 : f32 to vector<32x8xf32>
    %8 = arith.maximumf %6, %7 : vector<32x8xf32>
    %c0_6 = arith.constant 0 : index
    %c0_7 = arith.constant 0 : index
    %9 = vector.load %arg4[%c0_6, %c0_7] : memref<32x32xbf16, #tpu.memory_space<vmem>>, vector<32x32xbf16>
    %10 = arith.truncf %8 : vector<32x8xf32> to vector<32x8xbf16>
    %cst_8 = arith.constant dense<0.000000e+00> : vector<32x8xf32>
    %11 = tpu.matmul %9, %10, %cst_8 {dimension_numbers = #tpu.dot_dimension_numbers<[1], [0], [0], [1], [0, 0, 1, 1], [], []>} : vector<32x32xbf16>, vector<32x8xbf16>, vector<32x8xf32> -> vector<32x8xf32>
    %c0_9 = arith.constant 0 : index
    %c0_10 = arith.constant 0 : index
    %12 = vector.load %arg5[%c0_9, %c0_10] : memref<32x1xf32, #tpu.memory_space<vmem>>, vector<32x1xf32>
    %13 = vector.broadcast %12 : vector<32x1xf32> to vector<32x8xf32>
    %14 = arith.addf %11, %13 : vector<32x8xf32>
    %cst_11 = arith.constant 0.000000e+00 : f32
    %15 = vector.broadcast %cst_11 : f32 to vector<32x8xf32>
    %16 = arith.maximumf %14, %15 : vector<32x8xf32>
    %c0_12 = arith.constant 0 : index
    %c0_13 = arith.constant 0 : index
    %17 = vector.load %arg6[%c0_12, %c0_13] : memref<1x32xbf16, #tpu.memory_space<vmem>>, vector<1x32xbf16>
    %18 = arith.truncf %16 : vector<32x8xf32> to vector<32x8xbf16>
    %cst_14 = arith.constant dense<0.000000e+00> : vector<1x8xf32>
    %19 = tpu.matmul %17, %18, %cst_14 {dimension_numbers = #tpu.dot_dimension_numbers<[1], [0], [0], [1], [0, 0, 1, 1], [], []>} : vector<1x32xbf16>, vector<32x8xbf16>, vector<1x8xf32> -> vector<1x8xf32>
    %c0_15 = arith.constant 0 : index
    %c0_16 = arith.constant 0 : index
    %20 = vector.load %arg7[%c0_15, %c0_16] : memref<1x1xf32, #tpu.memory_space<vmem>>, vector<1x1xf32>
    %21 = vector.broadcast %20 : vector<1x1xf32> to vector<1x8xf32>
    %22 = arith.addf %19, %21 : vector<1x8xf32>
    %c0_17 = arith.constant 0 : index
    %c0_18 = arith.constant 0 : index
    %23 = vector.load %arg8[%c0_17, %c0_18] : memref<1x8xf32, #tpu.memory_space<vmem>>, vector<1x8xf32>
    tpu.vector_store %arg8[%c0_17, %c0_18], %22 {strides = array<i32>} : memref<1x8xf32, #tpu.memory_space<vmem>>, vector<1x8xf32>,
    return
  }
  func.func @transform_0(%arg0: i32) -> (i32, i32) {
    %c0_i32 = arith.constant 0 : i32
    %c0_i32_0 = arith.constant 0 : i32
    return %arg0, %c0_i32 : i32, i32
  }
  func.func @transform_1(%arg0: i32) -> (i32, i32) {
    %c0_i32 = arith.constant 0 : i32
    %c0_i32_0 = arith.constant 0 : i32
    %c0_i32_1 = arith.constant 0 : i32
    return %c0_i32, %c0_i32_0 : i32, i32
  }
  func.func @transform_2(%arg0: i32) -> (i32, i32) {
    %c0_i32 = arith.constant 0 : i32
    %c0_i32_0 = arith.constant 0 : i32
    %c0_i32_1 = arith.constant 0 : i32
    return %c0_i32, %c0_i32_0 : i32, i32
  }
  func.func @transform_3(%arg0: i32) -> (i32, i32) {
    %c0_i32 = arith.constant 0 : i32
    %c0_i32_0 = arith.constant 0 : i32
    %c0_i32_1 = arith.constant 0 : i32
    return %c0_i32, %c0_i32_0 : i32, i32
  }
  func.func @transform_4(%arg0: i32) -> (i32, i32) {
    %c0_i32 = arith.constant 0 : i32
    %c0_i32_0 = arith.constant 0 : i32
    %c0_i32_1 = arith.constant 0 : i32
    return %c0_i32, %c0_i32_0 : i32, i32
  }
  func.func @transform_5(%arg0: i32) -> (i32, i32) {
    %c0_i32 = arith.constant 0 : i32
    %c0_i32_0 = arith.constant 0 : i32
    %c0_i32_1 = arith.constant 0 : i32
    return %c0_i32, %c0_i32_0 : i32, i32
  }
  func.func @transform_6(%arg0: i32) -> (i32, i32) {
    %c0_i32 = arith.constant 0 : i32
    %c0_i32_0 = arith.constant 0 : i32
    %c0_i32_1 = arith.constant 0 : i32
    return %c0_i32, %c0_i32_0 : i32, i32
  }
  func.func @transform_7(%arg0: i32) -> (i32, i32) {
    %c0_i32 = arith.constant 0 : i32
    %c0_i32_0 = arith.constant 0 : i32
    return %c0_i32, %arg0 : i32, i32
  }
}

</mosaic_0001>

<llo_original>
// kernel: net_forward.1
$region0: #{net_forward.1}
  #allocation0 [shape = 'u32[]', space=smem, size = 0x4, offset = 0x4, fixed_abs, tag = 'smem constant byte address 0x4 - core index']
  #allocation1 [shape = 'u32[72,128]{1,0:T(1,128)}', space=vmem, size = 0x9000, scoped, tag = 'internal scratch']
  #allocation2 [shape = 'f32[1,1]{1,0:T(1,128)S(1)}', space=vmem, size = 0x200, scoped, tag = 'scoped memory for net_forward.1']
  %s0 = inlined_call_operand.vmem [shape: f32[8,16], index: 0, kind: input, shape index: {}]
  %s1 = inlined_call_operand.vmem [shape: bf16[32,16], index: 1, kind: input, shape index: {}]
  %s2 = inlined_call_operand.vmem [shape: f32[32,1], index: 2, kind: input, shape index: {}]
  %s3 = inlined_call_operand.vmem [shape: bf16[32,32], index: 3, kind: input, shape index: {}]
  %s4 = inlined_call_operand.vmem [shape: f32[32,1], index: 4, kind: input, shape index: {}]
  %s5 = inlined_call_operand.vmem [shape: bf16[1,32], index: 5, kind: input, shape index: {}]
  %s6 = inlined_call_operand.<no memory space> [shape: f32[1,1], index: 6, kind: input, shape index: {}]
  %s7 = inlined_call_operand.hbm [shape: f32[1,8], index: 7, kind: output, shape index: {}]
  %s8 = sld [smem:[#allocation0]]
  $region38: #{net_forward.1} parent=0
    _
  %s10 = ssub.s32 1, %s8
  %s11 = scalar_select 0, %s10, %s8
  %v12 = vstv %s6
  %13 = vst [vmem:[#allocation2] sm:$0x1] %v12
  $region1: #{net_forward.1} parent=0
    #allocation3 [shape = 'u8[512]{0}', space=vmem, size = 0x400, scoped, tag = 'output window, operand 0, single buffered']
    #allocation4 [shape = 's32[1]{0}', space=sflag, size = 0x4, scoped, tag = 'scoped memory for net_forward.1']
    %14 = vsyncpa [#allocation4], 0
    // Predicated region
    $region2: #{net_forward.1} parent=1 // pred_check
      _
    $region3: #{net_forward.1} parent=1 // pred_check_branch
      %16 = sbr.rel (0) target = $region5
    $region4: #{net_forward.1} parent=1 // pred_region
      _
    $region5: #{net_forward.1} parent=1 // pred_fallthru
      _
    // Predicated region
    $region6: #{net_forward.1} parent=1 // pred_check
      _
    $region7: #{net_forward.1} parent=1 // pred_check_branch
      %18 = sbr.rel (0) target = $region9
    $region8: #{net_forward.1} parent=1 // pred_region
      _
    $region9: #{net_forward.1} parent=1 // pred_fallthru
      _
    // Predicated region
    $region10: #{net_forward.1} parent=1 // pred_check
      _
    $region11: #{net_forward.1} parent=1 // pred_check_branch
      %20 = sbr.rel (0) target = $region13
    $region12: #{net_forward.1} parent=1 // pred_region
      _
    $region13: #{net_forward.1} parent=1 // pred_fallthru
      _
    // Predicated region
    $region14: #{net_forward.1} parent=1 // pred_check
      _
    $region15: #{net_forward.1} parent=1 // pred_check_branch
      %22 = sbr.rel (0) target = $region17
    $region16: #{net_forward.1} parent=1 // pred_region
      _
    $region17: #{net_forward.1} parent=1 // pred_fallthru
      _
    // Predicated region
    $region18: #{net_forward.1} parent=1 // pred_check
      _
    $region19: #{net_forward.1} parent=1 // pred_check_branch
      %24 = sbr.rel (0) target = $region21
    $region20: #{net_forward.1} parent=1 // pred_region
      _
    $region21: #{net_forward.1} parent=1 // pred_fallthru
      _
    // Predicated region
    $region22: #{net_forward.1} parent=1 // pred_check
      _
    $region23: #{net_forward.1} parent=1 // pred_check_branch
      %26 = sbr.rel (0) target = $region25
    $region24: #{net_forward.1} parent=1 // pred_region
      _
    $region25: #{net_forward.1} parent=1 // pred_fallthru
      _
    // Predicated region
    $region26: #{net_forward.1} parent=1 // pred_check
      _
    $region27: #{net_forward.1} parent=1 // pred_check_branch
      %28 = sbr.rel (0) target = $region29
    $region28: #{net_forward.1} parent=1 // pred_region
      _
    $region29: #{net_forward.1} parent=1 // pred_fallthru
      _
    %v30 = vld [vmem:[%s0] sm:$0xff]
    %v31 = vpack.c.bf16 %v30, %v30
    %v32 = vld [vmem:[%s1] sm:$0xf]
    %v33 = vld [vmem:[%s1 + $0x4] sm:$0xf]
    %v34 = vld [vmem:[%s1 + $0x8] sm:$0xf]
    %v35 = vld [vmem:[%s1 + $0xc] sm:$0xf]
    %v36 = vld [vmem:[%s2] sm:$0xff]
    %v37 = vld [vmem:[%s2 + $0x8] sm:$0xff]
    %v38 = vld [vmem:[%s2 + $0x10] sm:$0xff]
    %v39 = vld [vmem:[%s2 + $0x18] sm:$0xff]
    %41 = vset.pattern.permute.xlu0 0
    %42 = vperm.xlu0 %41, %v36
    %v43 = vpop.permute.xlu0 %42
    %46 = vset.pattern.permute.xlu0 0
    %47 = vperm.xlu0 %46, %v37
    %v48 = vpop.permute.xlu0 %47
    %51 = vset.pattern.permute.xlu0 0
    %52 = vperm.xlu0 %51, %v38
    %v53 = vpop.permute.xlu0 %52
    %56 = vset.pattern.permute.xlu0 0
    %57 = vperm.xlu0 %56, %v39
    %v58 = vpop.permute.xlu0 %57
    %v64 = vunpack.c.l.b16 %v32
    %v65 = vunpack.c.l.b16 %v33
    %v66 = vunpack.c.l.b16 %v34
    %v67 = vunpack.c.l.b16 %v35
    %v68 = vpack.c.b16 %v65, %v64
    %v69 = vpack.c.b16 %v67, %v66
    %vm70 = vcmask 130048
    %v72 = vsel %vm70, %v68, 0
    %v75 = vsel %vm70, %v69, 0
    %v78 = vsel %vm70, %v31, 0
    %80 = vmatpush.bf16.xpose.msra.mxu0 0
    %81 = vmatpush.bf16.xpose.msra.mxu0 0
    %82 = vmatpush.bf16.xpose.msra.mxu0 0
    %83 = vmatpush.bf16.xpose.msra.mxu0 0
    %84 = vmatpush.bf16.xpose.msra.mxu0 0
    %85 = vmatpush.bf16.xpose.msra.mxu0 0
    %86 = vmatpush.bf16.xpose.msra.mxu0 0
    %87 = vmatpush.bf16.xpose.msra.mxu0 %v78
    %88 = vmatmul.bf16.gmra.mxu0 %v72
    %v89 = vpop.f32.mrf.mxu0
    %v90 = vadd.f32 %v43, %v89
    %v91 = vpop.f32.mrf.mxu0
    %v92 = vadd.f32 %v48, %v91
    %93 = vmatmul.bf16.gmra.mxu0 %v75
    %v94 = vpop.f32.mrf.mxu0
    %v95 = vadd.f32 %v53, %v94
    %v96 = vpop.f32.mrf.mxu0
    %v97 = vadd.f32 %v58, %v96
    %98 = vdwg.mxu0
    %v99 = vmax.f32 %v90, 0.0
    %v100 = vmax.f32 %v92, 0.0
    %v101 = vmax.f32 %v95, 0.0
    %v102 = vmax.f32 %v97, 0.0
    %v103 = vld [vmem:[%s3] sm:$0xf]
    %v104 = vld [vmem:[%s3 + $0x4] sm:$0xf]
    %v105 = vld [vmem:[%s3 + $0x8] sm:$0xf]
    %v106 = vld [vmem:[%s3 + $0xc] sm:$0xf]
    %v107 = vpack.c.bf16 %v100, %v99
    %v108 = vpack.c.bf16 %v102, %v101
    %v109 = vld [vmem:[%s4] sm:$0xff]
    %v110 = vld [vmem:[%s4 + $0x8] sm:$0xff]
    %v111 = vld [vmem:[%s4 + $0x10] sm:$0xff]
    %v112 = vld [vmem:[%s4 + $0x18] sm:$0xff]
    %114 = vset.pattern.permute.xlu0 0
    %115 = vperm.xlu0 %114, %v109
    %v116 = vpop.permute.xlu0 %115
    %119 = vset.pattern.permute.xlu0 0
    %120 = vperm.xlu0 %119, %v110
    %v121 = vpop.permute.xlu0 %120
    %124 = vset.pattern.permute.xlu0 0
    %125 = vperm.xlu0 %124, %v111
    %v126 = vpop.permute.xlu0 %125
    %129 = vset.pattern.permute.xlu0 0
    %130 = vperm.xlu0 %129, %v112
    %v131 = vpop.permute.xlu0 %130
    %v137 = vunpack.c.l.b16 %v103
    %v138 = vunpack.c.l.b16 %v104
    %v139 = vunpack.c.l.b16 %v105
    %v140 = vunpack.c.l.b16 %v106
    %v141 = vpack.c.b16 %v138, %v137
    %v142 = vpack.c.b16 %v140, %v139
    %vm143 = vcmask 261120
    %v145 = vsel %vm143, %v141, 0
    %v148 = vsel %vm143, %v142, 0
    %150 = vmatpush.bf16.msra.mxu0 0
    %151 = vmatpush.bf16.msra.mxu0 0
    %152 = vmatpush.bf16.msra.mxu0 0
    %153 = vmatpush.bf16.msra.mxu0 0
    %154 = vmatpush.bf16.msra.mxu0 0
    %155 = vmatpush.bf16.msra.mxu0 0
    %156 = vmatpush.bf16.msra.mxu0 %v108
    %157 = vmatpush.bf16.msra.mxu0 %v107
    %158 = vmatmul.bf16.gmra.mxu0 %v145
    %v159 = vpop.f32.mrf.mxu0
    %v160 = vadd.f32 %v116, %v159
    %v161 = vpop.f32.mrf.mxu0
    %v162 = vadd.f32 %v121, %v161
    %163 = vmatmul.bf16.gmra.mxu0 %v148
    %v164 = vpop.f32.mrf.mxu0
    %v165 = vadd.f32 %v126, %v164
    %v166 = vpop.f32.mrf.mxu0
    %v167 = vadd.f32 %v131, %v166
    %168 = vdwg.mxu0
    %v169 = vmax.f32 %v160, 0.0
    %v170 = vmax.f32 %v162, 0.0
    %v171 = vmax.f32 %v165, 0.0
    %v172 = vmax.f32 %v167, 0.0
    %v173 = vld [vmem:[%s5] sm:$0x1]
    %v174 = vpack.c.bf16 %v170, %v169
    %v175 = vpack.c.bf16 %v172, %v171
    %v176 = vld [vmem:[#allocation2] sm:$0x1]
    %178 = vset.pattern.permute.xlu0 0
    %179 = vperm.xlu0 %178, %v176
    %v180 = vpop.permute.xlu0 %179
    %v182 = vperm.slane %v180, 0
    %v184 = vsel %vm143, %v173, 0
    %186 = vmatpush.bf16.msra.mxu0 0
    %187 = vmatpush.bf16.msra.mxu0 0
    %188 = vmatpush.bf16.msra.mxu0 0
    %189 = vmatpush.bf16.msra.mxu0 0
    %190 = vmatpush.bf16.msra.mxu0 0
    %191 = vmatpush.bf16.msra.mxu0 0
    %192 = vmatpush.bf16.msra.mxu0 %v175
    %193 = vmatpush.bf16.msra.mxu0 %v174
    %194 = vmatmul.bf16.gmra.mxu0 %v184
    %v195 = vpop.f32.mrf.mxu0
    %v196 = vadd.f32 %v182, %v195
    %v197 = vpop.f32.mrf.mxu0
    %198 = vdwg.mxu0
    %vm199 = vcmask 57344
    %200 = vst.msk [vmem:[#allocation3] sm:$0x1] %vm199, %v196
    // Predicated region
    $region30: #{net_forward.1} parent=1 // pred_check
      _
    $region31: #{net_forward.1} parent=1 // pred_check_branch
      %202 = sbr.rel (0) target = $region33
    $region32: #{net_forward.1} parent=1 // pred_region
      %204 = vsyncadd [#allocation4], 0
      %s206 = sshll.u32 [#allocation3], 4
      %s207 = int_to_ptr.vmem [resolvable:$true] %s206
      %s208 = sshll.u32 %s7, 4
      %s209 = int_to_ptr.hbm [resolvable:$true] %s208
      %211 = dma.vmem_to_hbm [thread:$0]  %s207, 16, %s209, [#allocation4]
    $region33: #{net_forward.1} parent=1 // pred_fallthru
      _
    // Predicated region
    $region34: #{net_forward.1} parent=1 // pred_check
      _
    $region35: #{net_forward.1} parent=1 // pred_check_branch
      %213 = sbr.rel (0) target = $region37
    $region36: #{net_forward.1} parent=1 // pred_region
      %215 = dma.done [#allocation4], 16
    $region37: #{net_forward.1} parent=1 // pred_fallthru
      _
    %216 = vsyncpa [#allocation4], 1

</llo_original>
